<compile_context>
chip_gen: v7x
topology: tpu7x:2x2x1
jax: 0.10.0
libtpu: 0.0.40
codegen_flags: <defaults>
</compile_context>

<pallas_src>
import functools

import jax
import jax.numpy as jnp
from jax.experimental import pallas as pl
from jax.experimental.pallas import tpu as pltpu


# ---------------------------------------------------------------------------
# Kernels
# ---------------------------------------------------------------------------

def _afb_fused_kernel(feat_ref, w1a_ref, b1_ref, w2_ref, b2_ref, out_ref):
    """Single-pass: pool + fc1 + relu + fc2 + sigmoid + channel gate."""
    f = feat_ref[...]                                   # (BN, C, HW)
    inv_hw = 1.0 / f.shape[-1]
    # f32 accumulation for the pooled mean (matters if the feature is bf16).
    x = jnp.sum(f.astype(jnp.float32), axis=-1) * inv_hw          # (BN, C)

    h = jnp.dot(x, w1a_ref[...], preferred_element_type=jnp.float32) + b1_ref[...]
    h = jnp.maximum(h, 0.0)                             # ReLU

    s = jnp.dot(h, w2_ref[...], preferred_element_type=jnp.float32) + b2_ref[...]
    s = jax.nn.sigmoid(s)                               # (BN, C) channel gates

    out_ref[...] = (f.astype(jnp.float32) * s[:, :, None]).astype(out_ref.dtype)


def _pool_sum_kernel(feat_ref, sum_ref):
    """Two-pass fallback, pass 1: per-channel spatial sums over HW tiles."""
    @pl.when(pl.program_id(1) == 0)
    def _():
        sum_ref[...] = jnp.zeros_like(sum_ref)
    sum_ref[...] += jnp.sum(feat_ref[...].astype(jnp.float32), axis=-1,
                            keepdims=True)              # (BN, C, 1)


def _gate_kernel(feat_ref, s_ref, out_ref):
    """Two-pass fallback, pass 2: stream the feature and apply the gate."""
    out_ref[...] = (feat_ref[...].astype(jnp.float32)
                    * s_ref[...]).astype(out_ref.dtype)


# ---------------------------------------------------------------------------
# Sizing helpers (all trace-time Python on static shapes)
# ---------------------------------------------------------------------------

def _tpu_hw():
    """(vmem_capacity_bytes, tensorcores_per_chip), conservative on failure."""
    vmem = 64 << 20                      # conservative default (v7x per-TC VMEM)
    try:
        vmem = int(pltpu.get_tpu_info().vmem_capacity_bytes)
    except Exception:
        pass
    # v7x pairs 2 TensorCores with 64 MiB VMEM per TC; v5e/v6e are 1 TC / 128 MiB.
    cores = 2 if vmem <= (64 << 20) else 1
    return vmem, cores


def _pick_bn(n, per_sample_bytes, feat_budget_bytes, num_cores):
    """Samples per grid step for the fused path (bn always divides n)."""
    cap = max(1, feat_budget_bytes // (4 * per_sample_bytes))
    if num_cores >= 2:
        # >= 2 grid steps per TensorCore so each core keeps in-DMA/compute/out-DMA
        # overlapped (2 steps total would give each v7x core a single, serialized
        # iteration).
        desired_steps = min(n, 2 * num_cores)
    else:
        # Single TC: 3-4 steps amortize the pipeline prologue/epilogue; a tiny
        # problem is cheaper as one step (~0.35 us per-step overhead).
        total_bytes = n * per_sample_bytes
        desired_steps = 1 if total_bytes <= (2 << 20) else min(n, 4)
    cap = min(cap, max(1, n // desired_steps))
    bn = 1
    for d in range(1, min(cap, n) + 1):       # largest divisor of n <= cap
        if n % d == 0:
            bn = d
    return bn


def _pick_thw(hw, c, bn, itemsize, feat_budget_bytes):
    """HW tile for the two-pass path (divides hw; 128-multiple when possible)."""
    cap = max(1, feat_budget_bytes // (4 * bn * c * itemsize))
    if hw <= cap:
        return hw
    best = 0
    t = 128
    while t <= min(hw, cap):
        if hw % t == 0:
            best = t
        t += 128
    if best:
        return best
    best = 1
    for d in range(2, min(hw, cap) + 1):      # lane-sparse last resort
        if hw % d == 0:
            best = d
    return best


def _vmem_limit(bytes_needed, limit_cap):
    return int(min(max(bytes_needed + (4 << 20), 16 << 20), limit_cap))


# ---------------------------------------------------------------------------
# Forward
# ---------------------------------------------------------------------------

@functools.partial(jax.jit, static_argnames=("force_two_pass",))
def afb_forward(feature, snr_row, w1, b1, w2, b2, force_two_pass=False):
    """feature: (N, C, H, W); snr_row: (1, k); w1: (C, C+k); w2: (C, C)."""
    n, c, h, w = feature.shape
    hw = h * w
    feat3 = feature.reshape(n, c, hw)

    w1a = w1[:, :c].T                                    # (C, C)
    # Fold the batch-invariant SNR branch into the fc1 bias.
    b1_eff = (snr_row @ w1[:, c:].T + b1).reshape(1, c)  # (1, C)
    w2t = w2.T                                           # (C, C)
    b2r = b2.reshape(1, c)

    itemsize = feature.dtype.itemsize
    vmem_cap, num_cores = _tpu_hw()
    feat_budget = (vmem_cap * 5) // 8                    # ~80 MiB (v5e/v6e), ~40 MiB (v7x)
    limit_cap = (110 << 20) if vmem_cap > (96 << 20) else (52 << 20)
    weight_bytes = 2 * 2 * (c * c + c) * 4               # 2 FCs, double-buffered f32

    per_sample = c * hw * itemsize
    fused_fits = (4 * per_sample + weight_bytes) <= feat_budget

    if fused_fits and not force_two_pass:
        # ---- Fused single-pass path: 2x feature bytes of HBM traffic. ----
        bn = _pick_bn(n, per_sample, feat_budget, num_cores)
        vmem_limit = _vmem_limit(4 * bn * per_sample + weight_bytes, limit_cap)

        grid_spec = pltpu.PrefetchScalarGridSpec(
            num_scalar_prefetch=0,
            grid=(n // bn,),
            in_specs=[
                pl.BlockSpec((bn, c, hw), lambda i: (i, 0, 0)),   # feature slab
                pl.BlockSpec((c, c), lambda i: (0, 0)),           # W1a^T (resident)
                pl.BlockSpec((1, c), lambda i: (0, 0)),           # b1_eff
                pl.BlockSpec((c, c), lambda i: (0, 0)),           # W2^T
                pl.BlockSpec((1, c), lambda i: (0, 0)),           # b2
            ],
            out_specs=pl.BlockSpec((bn, c, hw), lambda i: (i, 0, 0)),
        )
        out3 = pl.pallas_call(
            _afb_fused_kernel,
            out_shape=jax.ShapeDtypeStruct((n, c, hw), feature.dtype),
            grid_spec=grid_spec,
            compiler_params=pltpu.CompilerParams(
                dimension_semantics=("parallel",),
                vmem_limit_bytes=vmem_limit),
        )(feat3, w1a, b1_eff, w2t, b2r)
        return out3.reshape(n, c, h, w)

    # ---- Two-pass fallback: HW-tiled pool, then streaming gate (3x bytes). ----
    bn = 1
    thw = _pick_thw(hw, c, bn, itemsize, feat_budget)
    slab = bn * c * thw * itemsize
    vmem_limit = _vmem_limit(4 * slab, limit_cap)

    # Pass 1: per-channel sums, accumulated across the HW grid axis.
    sums = pl.pallas_call(
        _pool_sum_kernel,
        out_shape=jax.ShapeDtypeStruct((n, c, 1), jnp.float32),
        grid_spec=pltpu.PrefetchScalarGridSpec(
            num_scalar_prefetch=0,
            grid=(n // bn, hw // thw),
            in_specs=[pl.BlockSpec((bn, c, thw), lambda i, j: (i, 0, j))],
            out_specs=pl.BlockSpec((bn, c, 1), lambda i, j: (i, 0, 0)),
        ),
        compiler_params=pltpu.CompilerParams(
            dimension_semantics=("parallel", "arbitrary"),
            vmem_limit_bytes=vmem_limit),
    )(feat3)

    # Tiny FCs on the pooled means in plain JAX (negligible vs. feature traffic).
    x = sums[:, :, 0] * (1.0 / hw)                               # (N, C)
    hdd = jax.nn.relu(x @ w1a + b1_eff)
    gates = jax.nn.sigmoid(hdd @ w2t + b2r).astype(jnp.float32).reshape(n, c, 1)

    # Pass 2: stream the feature again and apply the channel gate.
    out3 = pl.pallas_call(
        _gate_kernel,
        out_shape=jax.ShapeDtypeStruct((n, c, hw), feature.dtype),
        grid_spec=pltpu.PrefetchScalarGridSpec(
            num_scalar_prefetch=0,
            grid=(n // bn, hw // thw),
            in_specs=[pl.BlockSpec((bn, c, thw), lambda i, j: (i, 0, j)),
                      pl.BlockSpec((bn, c, 1), lambda i, j: (i, 0, 0))],
            out_specs=pl.BlockSpec((bn, c, thw), lambda i, j: (i, 0, j)),
        ),
        compiler_params=pltpu.CompilerParams(
            dimension_semantics=("parallel", "parallel"),
            vmem_limit_bytes=vmem_limit),
    )(feat3, gates)
    return out3.reshape(n, c, h, w)


def afb_reference(feature, snr_row, w1, b1, w2, b2):
    """Plain-JAX replica of the PyTorch forward for verification."""
    n = feature.shape[0]
    x = jnp.mean(feature, axis=(2, 3))                       # (N, C)
    snr = jnp.broadcast_to(snr_row, (n, snr_row.shape[1]))   # (N, k)
    x = jnp.concatenate([x, snr], axis=1)                    # (N, C+k)
    x = jax.nn.relu(x @ w1.T + b1)
    x = jax.nn.sigmoid(x @ w2.T + b2)
    return feature * x[:, :, None, None]


if __name__ == "__main__":
    # Small shapes consistent with the module: batch=4, channels=4, spatial=16x16
    # (H*W = 256, a multiple of 128, so stores stay lane-dense).
    N, C, H, W = 4, 4, 16, 16
    SNR = 10.0          # single-SNR path (multiSNR=False); k = 1
    K = 1

    key = jax.random.PRNGKey(0)
    k_feat, k_w1, k_b1, k_w2, k_b2 = jax.random.split(key, 5)

    feature = jax.random.normal(k_feat, (N, C, H, W), dtype=jnp.float32)

    # nn.Linear shapes: weight (out, in), bias (out,)
    w1 = jax.random.normal(k_w1, (C, C + K), dtype=jnp.float32) * 0.1
    b1 = jax.random.normal(k_b1, (C,), dtype=jnp.float32) * 0.1
    w2 = jax.random.normal(k_w2, (C, C), dtype=jnp.float32) * 0.1
    b2 = jax.random.normal(k_b2, (C,), dtype=jnp.float32) * 0.1

    snr_row = jnp.full((1, K), SNR, dtype=jnp.float32)

    ref = afb_reference(feature, snr_row, w1, b1, w2, b2)

    # Fused single-pass path (default).
    out = jax.block_until_ready(afb_forward(feature, snr_row, w1, b1, w2, b2))
    assert out.shape == (N, C, H, W)
    assert jnp.allclose(out, ref, atol=1e-5, rtol=1e-5), "fused path mismatch"

    # Two-pass fallback path (exercised explicitly so large-slab deployments are
    # known to work; normally it only triggers when a BN=1 slab exceeds VMEM).
    out2 = jax.block_until_ready(
        afb_forward(feature, snr_row, w1, b1, w2, b2, force_two_pass=True))
    assert jnp.allclose(out2, ref, atol=1e-5, rtol=1e-5), "two-pass path mismatch"

    print("KERNEL_OK")
</pallas_src>

<mosaic_0001>
module attributes {stable_mosaic.version = 11 : i64} {
  func.func @_afb_fused_kernel(%arg0: i32, %arg1: memref<1x4x256xf32, #tpu.memory_space<vmem>>, %arg2: memref<4x4xf32, #tpu.memory_space<vmem>>, %arg3: memref<1x4xf32, #tpu.memory_space<vmem>>, %arg4: memref<4x4xf32, #tpu.memory_space<vmem>>, %arg5: memref<1x4xf32, #tpu.memory_space<vmem>>, %arg6: memref<1x4x256xf32, #tpu.memory_space<vmem>>) attributes {dimension_semantics = [#tpu.dimension_semantics<parallel>], iteration_bounds = array<i64: 4>, scalar_prefetch = 0 : i64, scratch_operands = 0 : i64, tpu.core_type = #tpu.core_type<tc>, window_params = [{transform_indices = @transform_0, window_bounds = array<i64: 1, 4, 256>}, {pipeline_mode = #tpu.pipeline_mode<synchronous>, transform_indices = @transform_1, window_bounds = array<i64: 4, 4>}, {pipeline_mode = #tpu.pipeline_mode<synchronous>, transform_indices = @transform_2, window_bounds = array<i64: 1, 4>}, {pipeline_mode = #tpu.pipeline_mode<synchronous>, transform_indices = @transform_3, window_bounds = array<i64: 4, 4>}, {pipeline_mode = #tpu.pipeline_mode<synchronous>, transform_indices = @transform_4, window_bounds = array<i64: 1, 4>}, {transform_indices = @transform_5, window_bounds = array<i64: 1, 4, 256>}]} {
    %c0 = arith.constant 0 : index
    %c0_0 = arith.constant 0 : index
    %c0_1 = arith.constant 0 : index
    %0 = vector.load %arg1[%c0, %c0_0, %c0_1] : memref<1x4x256xf32, #tpu.memory_space<vmem>>, vector<1x4x256xf32>
    %cst = arith.constant dense<0.000000e+00> : vector<1x4xf32>
    %1 = vector.multi_reduction <add>, %0, %cst [2] : vector<1x4x256xf32> to vector<1x4xf32>
    %cst_2 = arith.constant 3.906250e-03 : f32
    %2 = vector.broadcast %cst_2 : f32 to vector<1x4xf32>
    %3 = arith.mulf %1, %2 : vector<1x4xf32>
    %c0_3 = arith.constant 0 : index
    %c0_4 = arith.constant 0 : index
    %4 = vector.load %arg2[%c0_3, %c0_4] : memref<4x4xf32, #tpu.memory_space<vmem>>, vector<4x4xf32>
    %cst_5 = arith.constant dense<0.000000e+00> : vector<1x4xf32>
    %5 = tpu.matmul %3, %4, %cst_5 {dimension_numbers = #tpu.dot_dimension_numbers<[1], [0], [0], [1], [0, 0, 1, 1], [], []>} : vector<1x4xf32>, vector<4x4xf32>, vector<1x4xf32> -> vector<1x4xf32>
    %c0_6 = arith.constant 0 : index
    %c0_7 = arith.constant 0 : index
    %6 = vector.load %arg3[%c0_6, %c0_7] : memref<1x4xf32, #tpu.memory_space<vmem>>, vector<1x4xf32>
    %7 = arith.addf %5, %6 : vector<1x4xf32>
    %cst_8 = arith.constant 0.000000e+00 : f32
    %8 = vector.broadcast %cst_8 : f32 to vector<1x4xf32>
    %9 = arith.maximumf %7, %8 : vector<1x4xf32>
    %c0_9 = arith.constant 0 : index
    %c0_10 = arith.constant 0 : index
    %10 = vector.load %arg4[%c0_9, %c0_10] : memref<4x4xf32, #tpu.memory_space<vmem>>, vector<4x4xf32>
    %cst_11 = arith.constant dense<0.000000e+00> : vector<1x4xf32>
    %11 = tpu.matmul %9, %10, %cst_11 {dimension_numbers = #tpu.dot_dimension_numbers<[1], [0], [0], [1], [0, 0, 1, 1], [], []>} : vector<1x4xf32>, vector<4x4xf32>, vector<1x4xf32> -> vector<1x4xf32>
    %c0_12 = arith.constant 0 : index
    %c0_13 = arith.constant 0 : index
    %12 = vector.load %arg5[%c0_12, %c0_13] : memref<1x4xf32, #tpu.memory_space<vmem>>, vector<1x4xf32>
    %13 = arith.addf %11, %12 : vector<1x4xf32>
    %14 = arith.negf %13 : vector<1x4xf32>
    %15 = math.exp %14 : vector<1x4xf32>
    %cst_14 = arith.constant 1.000000e+00 : f32
    %16 = vector.broadcast %cst_14 : f32 to vector<1x4xf32>
    %17 = arith.addf %16, %15 : vector<1x4xf32>
    %18 = arith.divf %16, %17 : vector<1x4xf32>
    %19 = vector.shape_cast %18 : vector<1x4xf32> to vector<1x4x1xf32>
    %20 = vector.broadcast %19 : vector<1x4x1xf32> to vector<1x4x256xf32>
    %21 = arith.mulf %0, %20 : vector<1x4x256xf32>
    %c0_15 = arith.constant 0 : index
    %c0_16 = arith.constant 0 : index
    %c0_17 = arith.constant 0 : index
    %22 = vector.load %arg6[%c0_15, %c0_16, %c0_17] : memref<1x4x256xf32, #tpu.memory_space<vmem>>, vector<1x4x256xf32>
    tpu.vector_store %arg6[%c0_15, %c0_16, %c0_17], %21 {strides = array<i32>} : memref<1x4x256xf32, #tpu.memory_space<vmem>>, vector<1x4x256xf32>,
    return
  }
  func.func @transform_0(%arg0: i32) -> (i32, i32, i32) {
    %c0_i32 = arith.constant 0 : i32
    %c0_i32_0 = arith.constant 0 : i32
    %c0_i32_1 = arith.constant 0 : i32
    return %arg0, %c0_i32, %c0_i32_0 : i32, i32, i32
  }
  func.func @transform_1(%arg0: i32) -> (i32, i32) {
    %c0_i32 = arith.constant 0 : i32
    %c0_i32_0 = arith.constant 0 : i32
    %c0_i32_1 = arith.constant 0 : i32
    return %c0_i32, %c0_i32_0 : i32, i32
  }
  func.func @transform_2(%arg0: i32) -> (i32, i32) {
    %c0_i32 = arith.constant 0 : i32
    %c0_i32_0 = arith.constant 0 : i32
    %c0_i32_1 = arith.constant 0 : i32
    return %c0_i32, %c0_i32_0 : i32, i32
  }
  func.func @transform_3(%arg0: i32) -> (i32, i32) {
    %c0_i32 = arith.constant 0 : i32
    %c0_i32_0 = arith.constant 0 : i32
    %c0_i32_1 = arith.constant 0 : i32
    return %c0_i32, %c0_i32_0 : i32, i32
  }
  func.func @transform_4(%arg0: i32) -> (i32, i32) {
    %c0_i32 = arith.constant 0 : i32
    %c0_i32_0 = arith.constant 0 : i32
    %c0_i32_1 = arith.constant 0 : i32
    return %c0_i32, %c0_i32_0 : i32, i32
  }
  func.func @transform_5(%arg0: i32) -> (i32, i32, i32) {
    %c0_i32 = arith.constant 0 : i32
    %c0_i32_0 = arith.constant 0 : i32
    %c0_i32_1 = arith.constant 0 : i32
    return %arg0, %c0_i32, %c0_i32_0 : i32, i32, i32
  }
}

</mosaic_0001>

<llo_original>
// kernel: afb_forward.1
$region0: #{afb_forward.1}
  #allocation0 [shape = 'u32[]', space=smem, size = 0x4, offset = 0x4, fixed_abs, tag = 'smem constant byte address 0x4 - core index']
  #allocation1 [shape = 'u32[144,128]{1,0:T(1,128)}', space=vmem, size = 0x12000, scoped, tag = 'internal scratch']
  %s0 = inlined_call_operand.vmem [shape: f32[4,4,256], index: 0, kind: input, shape index: {}]
  %s1 = inlined_call_operand.vmem [shape: f32[4,4], index: 1, kind: input, shape index: {}]
  %s2 = inlined_call_operand.vmem [shape: f32[1,4], index: 2, kind: input, shape index: {}]
  %s3 = inlined_call_operand.vmem [shape: f32[4,4], index: 3, kind: input, shape index: {}]
  %s4 = inlined_call_operand.vmem [shape: f32[1,4], index: 4, kind: input, shape index: {}]
  %s5 = inlined_call_operand.vmem [shape: f32[4,4,256], index: 5, kind: output, shape index: {}]
  %s6 = sld [smem:[#allocation0]]
  $region53: #{afb_forward.1} parent=0
    _
  %s8 = ssub.s32 1, %s6
  %s9 = scalar_select 0, %s8, %s6
  loop: start=0, step=1, limit=6
  $region2: #{afb_forward.1} parent=0 // loop_pre_header
    _
  $region3: #{afb_forward.1} parent=0 // loop_header
    %s11 = sphi 0, %s15
    %p12 = scmp.ge.s32.totalorder %s11, 6
    %s21 = sphi 0, %s23
    %s24 = sphi 0, %s21
    %s25 = sphi 0, %s24
    %s41 = sphi 0, %s25
    %s45 = sphi 0, %s45
    %s47 = sphi 0, %s45
    %s48 = sphi 0, %s47
    %s62 = sphi 0, %s48
    %s66 = sphi 0, %s66
    %s68 = sphi 0, %s66
    %s69 = sphi 0, %s68
    %s83 = sphi 0, %s69
    %s87 = sphi 0, %s87
    %s89 = sphi 0, %s87
    %s90 = sphi 0, %s89
    %s104 = sphi 0, %s90
    %s108 = sphi 0, %s108
    %s110 = sphi 0, %s108
    %s111 = sphi 0, %s110
    %s125 = sphi 0, %s111
    %s131 = sphi 0, %s133
    %s134 = sphi 0, %s131
    %s135 = sphi 0, %s134
    %s151 = sphi 0, %s135
  $region4: #{afb_forward.1} parent=0 // loop_header_branch
    %14 = sbr.rel (%p12) target = $region8
  $region5: #{afb_forward.1} parent=0 // loop_body
    %s16 = ssub.s32 %s11, 1
    %s17 = ssub.s32 %s11, 2
    %s18 = sadd.s32 %s11, 1
    %s19 = ssub.s32 %s11, %s18
    %p20 = scmp.eq.s32.totalorder %s19, 0
    %s22 = sadd.s32 %s21, 1
    %s23 = scalar_select %p20, %s21, %s22
    %p26 = pneg %p20
    %p27 = scmp.eq.s32.totalorder %s11, 3
    %p28 = por %p26, %p27
    %p29 = scmp.ne.s32.totalorder %s21, %s24
    %p30 = scmp.eq.s32.totalorder %s11, 0
    %p31 = por %p29, %p30
    %p32 = scmp.ne.s32.totalorder %s21, %s24
    %p33 = scmp.eq.s32.totalorder %s16, 3
    %p34 = por %p32, %p33
    %p35 = scmp.ne.s32.totalorder %s24, %s25
    %p36 = scmp.eq.s32.totalorder %s16, 0
    %p37 = por %p35, %p36
    %p38 = scmp.ne.s32.totalorder %s24, %s25
    %p39 = scmp.eq.s32.totalorder %s17, 3
    %p40 = por %p38, %p39
    %p42 = scmp.ne.s32.totalorder %s25, %s41
    %p43 = scmp.eq.s32.totalorder %s17, 0
    %p44 = por %p42, %p43
    %s46 = sadd.s32 %s45, 1
    %p49 = scmp.eq.s32.totalorder %s11, 3
    %p50 = scmp.ne.s32.totalorder %s45, %s47
    %p51 = scmp.eq.s32.totalorder %s11, 0
    %p52 = por %p50, %p51
    %p53 = scmp.ne.s32.totalorder %s45, %s47
    %p54 = scmp.eq.s32.totalorder %s16, 3
    %p55 = por %p53, %p54
    %p56 = scmp.ne.s32.totalorder %s47, %s48
    %p57 = scmp.eq.s32.totalorder %s16, 0
    %p58 = por %p56, %p57
    %p59 = scmp.ne.s32.totalorder %s47, %s48
    %p60 = scmp.eq.s32.totalorder %s17, 3
    %p61 = por %p59, %p60
    %p63 = scmp.ne.s32.totalorder %s48, %s62
    %p64 = scmp.eq.s32.totalorder %s17, 0
    %p65 = por %p63, %p64
    %s67 = sadd.s32 %s66, 1
    %p70 = scmp.eq.s32.totalorder %s11, 3
    %p71 = scmp.ne.s32.totalorder %s66, %s68
    %p72 = scmp.eq.s32.totalorder %s11, 0
    %p73 = por %p71, %p72
    %p74 = scmp.ne.s32.totalorder %s66, %s68
    %p75 = scmp.eq.s32.totalorder %s16, 3
    %p76 = por %p74, %p75
    %p77 = scmp.ne.s32.totalorder %s68, %s69
    %p78 = scmp.eq.s32.totalorder %s16, 0
    %p79 = por %p77, %p78
    %p80 = scmp.ne.s32.totalorder %s68, %s69
    %p81 = scmp.eq.s32.totalorder %s17, 3
    %p82 = por %p80, %p81
    %p84 = scmp.ne.s32.totalorder %s69, %s83
    %p85 = scmp.eq.s32.totalorder %s17, 0
    %p86 = por %p84, %p85
    %s88 = sadd.s32 %s87, 1
    %p91 = scmp.eq.s32.totalorder %s11, 3
    %p92 = scmp.ne.s32.totalorder %s87, %s89
    %p93 = scmp.eq.s32.totalorder %s11, 0
    %p94 = por %p92, %p93
    %p95 = scmp.ne.s32.totalorder %s87, %s89
    %p96 = scmp.eq.s32.totalorder %s16, 3
    %p97 = por %p95, %p96
    %p98 = scmp.ne.s32.totalorder %s89, %s90
    %p99 = scmp.eq.s32.totalorder %s16, 0
    %p100 = por %p98, %p99
    %p101 = scmp.ne.s32.totalorder %s89, %s90
    %p102 = scmp.eq.s32.totalorder %s17, 3
    %p103 = por %p101, %p102
    %p105 = scmp.ne.s32.totalorder %s90, %s104
    %p106 = scmp.eq.s32.totalorder %s17, 0
    %p107 = por %p105, %p106
    %s109 = sadd.s32 %s108, 1
    %p112 = scmp.eq.s32.totalorder %s11, 3
    %p113 = scmp.ne.s32.totalorder %s108, %s110
    %p114 = scmp.eq.s32.totalorder %s11, 0
    %p115 = por %p113, %p114
    %p116 = scmp.ne.s32.totalorder %s108, %s110
    %p117 = scmp.eq.s32.totalorder %s16, 3
    %p118 = por %p116, %p117
    %p119 = scmp.ne.s32.totalorder %s110, %s111
    %p120 = scmp.eq.s32.totalorder %s16, 0
    %p121 = por %p119, %p120
    %p122 = scmp.ne.s32.totalorder %s110, %s111
    %p123 = scmp.eq.s32.totalorder %s17, 3
    %p124 = por %p122, %p123
    %p126 = scmp.ne.s32.totalorder %s111, %s125
    %p127 = scmp.eq.s32.totalorder %s17, 0
    %p128 = por %p126, %p127
    %s129 = ssub.s32 %s11, %s18
    %p130 = scmp.eq.s32.totalorder %s129, 0
    %s132 = sadd.s32 %s131, 1
    %s133 = scalar_select %p130, %s131, %s132
    %p136 = pneg %p130
    %p137 = scmp.eq.s32.totalorder %s11, 3
    %p138 = por %p136, %p137
    %p139 = scmp.ne.s32.totalorder %s131, %s134
    %p140 = scmp.eq.s32.totalorder %s11, 0
    %p141 = por %p139, %p140
    %p142 = scmp.ne.s32.totalorder %s131, %s134
    %p143 = scmp.eq.s32.totalorder %s16, 3
    %p144 = por %p142, %p143
    %p145 = scmp.ne.s32.totalorder %s134, %s135
    %p146 = scmp.eq.s32.totalorder %s16, 0
    %p147 = por %p145, %p146
    %p148 = scmp.ne.s32.totalorder %s134, %s135
    %p149 = scmp.eq.s32.totalorder %s17, 3
    %p150 = por %p148, %p149
    %p152 = scmp.ne.s32.totalorder %s135, %s151
    %p153 = scmp.eq.s32.totalorder %s17, 0
    %p154 = por %p152, %p153
    %p155 = scmp.le.s32.totalorder 1, %s11
    %p156 = scmp.lt.s32.totalorder %s11, 5
    %p157 = pnand %p155, %p156
    %p158 = pneg %p157
    // Predicated region
    $region9: #{afb_forward.1} parent=5 // pred_check
      _
    $region10: #{afb_forward.1} parent=5 // pred_check_branch
      %160 = sbr.rel (%p157) target = $region12
    $region11: #{afb_forward.1} parent=5 // pred_region
      %s161 = ssub.s32 %s11, 1
      // Predicated region
      $region13: #{afb_forward.1} parent=11 // pred_check
        %p162 = pneg %p58
      $region14: #{afb_forward.1} parent=11 // pred_check_branch
        %164 = sbr.rel (%p162) target = $region16
      $region15: #{afb_forward.1} parent=11 // pred_region
        _
      $region16: #{afb_forward.1} parent=11 // pred_fallthru
        _
      // Predicated region
      $region17: #{afb_forward.1} parent=11 // pred_check
        %p165 = pneg %p79
      $region18: #{afb_forward.1} parent=11 // pred_check_branch
        %167 = sbr.rel (%p165) target = $region20
      $region19: #{afb_forward.1} parent=11 // pred_region
        _
      $region20: #{afb_forward.1} parent=11 // pred_fallthru
        _
      // Predicated region
      $region21: #{afb_forward.1} parent=11 // pred_check
        %p168 = pneg %p100
      $region22: #{afb_forward.1} parent=11 // pred_check_branch
        %170 = sbr.rel (%p168) target = $region24
      $region23: #{afb_forward.1} parent=11 // pred_region
        _
      $region24: #{afb_forward.1} parent=11 // pred_fallthru
        _
      // Predicated region
      $region25: #{afb_forward.1} parent=11 // pred_check
        %p171 = pneg %p121
      $region26: #{afb_forward.1} parent=11 // pred_check_branch
        %173 = sbr.rel (%p171) target = $region28
      $region27: #{afb_forward.1} parent=11 // pred_region
        _
      $region28: #{afb_forward.1} parent=11 // pred_fallthru
        _
    $region12: #{afb_forward.1} parent=5 // pred_fallthru
      _
    %p174 = scmp.lt.s32.totalorder %s11, 4
    // Predicated region
    $region29: #{afb_forward.1} parent=5 // pred_check
      %p175 = pneg %p174
    $region30: #{afb_forward.1} parent=5 // pred_check_branch
      %177 = sbr.rel (%p175) target = $region32
    $region31: #{afb_forward.1} parent=5 // pred_region
      // Predicated region
      $region33: #{afb_forward.1} parent=31 // pred_check
        %p178 = pneg %p31
      $region34: #{afb_forward.1} parent=31 // pred_check_branch
        %180 = sbr.rel (%p178) target = $region36
      $region35: #{afb_forward.1} parent=31 // pred_region
        %p181 = scmp.lt.s32.totalorder %s11, 3
        %s182 = scalar_select %p181, %s11, 3
        %s183 = smul.addr %s182, 2
        %s184 = smul.addr %s183, 4
        %s185 = scalar_lea.vmem %s0, %s184
      $region36: #{afb_forward.1} parent=31 // pred_fallthru
        _
    $region32: #{afb_forward.1} parent=5 // pred_fallthru
      _
    %p186 = scmp.le.s32.totalorder 1, %s11
    %p187 = scmp.lt.s32.totalorder %s11, 5
    %p188 = pnand %p186, %p187
    %p189 = pneg %p188
    // Predicated region
    $region37: #{afb_forward.1} parent=5 // pred_check
      _
    $region38: #{afb_forward.1} parent=5 // pred_check_branch
      %191 = sbr.rel (%p188) target = $region40
    $region39: #{afb_forward.1} parent=5 // pred_region
      %s192 = ssub.s32 %s11, 1
      %p193 = scmp.lt.s32.totalorder %s16, 3
      %s194 = scalar_select %p193, %s16, 3
      %s195 = smul.addr %s194, 2
      %s196 = smul.addr %s195, 4
      %s197 = scalar_lea.vmem %s0, %s196
      %p198 = pneg %p37
      %p199 = pneg %p34
      %p200 = pneg %p58
      %p201 = pneg %p55
      %p202 = pneg %p79
      %p203 = pneg %p76
      %p204 = pneg %p100
      %p205 = pneg %p97
      %p206 = pneg %p121
      %p207 = pneg %p118
      %p208 = pneg %p147
      %p209 = pneg %p144
      %p210 = scmp.lt.s32.totalorder %s16, 3
      %s211 = scalar_select %p210, %s16, 3
      %s212 = smul.addr %s211, 2
      %s213 = smul.addr %s212, 4
      %s214 = scalar_lea.vmem %s5, %s213
      %p215 = scmp.lt.s32.totalorder %s16, 3
      %s216 = scalar_select %p215, %s16, 3
      %s217 = smul.addr %s216, 2
      %s218 = smul.addr %s217, 4
      %s219 = scalar_lea.vmem %s0, %s218
      %p220 = scmp.lt.s32.totalorder %s16, 3
      %s221 = scalar_select %p220, %s16, 3
      %s222 = smul.addr %s221, 2
      %s223 = smul.addr %s222, 4
      %s224 = scalar_lea.vmem %s5, %s223
      %v225 = vld [vmem:[%s219] sm:$0xff]
      %v227 = vcombine.high %v225, %v225
      %vm229 = vcmask 1043456
      %v230 = vsel %vm229, %v225, 0.0
      %v231 = vsel %vm229, %v227, 0.0
      %v232 = vadd.f32 %v230, %v231
      %233 = vadd.xlane.f32.xlu0 %v232
      %v234 = vpop.xlane.xlu0 %233
      %v235 = vmul.f32 %v234, 0.00390625
      %v236 = vld [vmem:[%s1] sm:$0xf]
      %v237 = vld [vmem:[%s2] sm:$0x1]
      %v239 = vlaneseq
      %v240 = vand.u32 %v239, 127
      %v241 = vlaneseq
      %v242 = vshrl.u32 %v241, 7
      %v243 = vsub.s32 %v240, %v242
      %v244 = vrot.slane %v235, %v243
      %vm245 = vcmask 31744
      %v246 = vsel %vm245, %v244, 0
      %v249 = vsel %vm229, %v236, 0
      %251 = vmatprep.subr.mxu0 0.0
      %252 = vmatpush1.msra.mxu0 %v249
      %253 = vmatprep.subr.mxu0 0.0
      %254 = vmatpush1.msra.mxu0 0.0
      %255 = vmatprep.subr.mxu0 0.0
      %256 = vmatpush1.msra.mxu0 0.0
      %257 = vmatprep.subr.mxu0 0.0
      %258 = vmatpush1.msra.mxu0 0.0
      %259 = vmatprep.subr.mxu0 0.0
      %260 = vmatpush1.msra.mxu0 0.0
      %261 = vmatprep.subr.mxu0 0.0
      %262 = vmatpush1.msra.mxu0 0.0
      %263 = vmatprep.subr.mxu0 0.0
      %264 = vmatpush1.msra.mxu0 0.0
      %265 = vmatprep.subr.mxu0 0.0
      %266 = vmatpush1.msra.mxu0 0.0
      %267 = vmatprep.subr.mxu0 0.0
      %268 = vmatpush1.msra.mxu0 0.0
      %269 = vmatprep.subr.mxu0 0.0
      %270 = vmatpush1.msra.mxu0 0.0
      %271 = vmatprep.subr.mxu0 0.0
      %272 = vmatpush1.msra.mxu0 0.0
      %273 = vmatprep.subr.mxu0 0.0
      %274 = vmatpush1.msra.mxu0 0.0
      %275 = vmatprep.subr.mxu0 0.0
      %276 = vmatpush1.msra.mxu0 0.0
      %277 = vmatprep.subr.mxu0 0.0
      %278 = vmatpush1.msra.mxu0 0.0
      %279 = vmatprep.subr.mxu0 0.0
      %280 = vmatpush1.msra.mxu0 0.0
      %281 = vmatprep.subr.mxu0 0.0
      %282 = vmatpush1.msra.mxu0 0.0
      %283 = vmatprep.subr.mxu0 0.0
      %284 = vmatpush1.msra.mxu0 0.0
      %285 = vmatprep.subr.mxu0 0.0
      %286 = vmatpush1.msra.mxu0 0.0
      %287 = vmatprep.subr.mxu0 0.0
      %288 = vmatpush1.msra.mxu0 0.0
      %289 = vmatprep.subr.mxu0 0.0
      %290 = vmatpush1.msra.mxu0 0.0
      %291 = vmatprep.subr.mxu0 0.0
      %292 = vmatpush1.msra.mxu0 0.0
      %293 = vmatprep.subr.mxu0 0.0
      %294 = vmatpush1.msra.mxu0 0.0
      %295 = vmatprep.subr.mxu0 0.0
      %296 = vmatpush1.msra.mxu0 0.0
      %297 = vmatprep.subr.mxu0 0.0
      %298 = vmatpush1.msra.mxu0 0.0
      %299 = vmatprep.subr.mxu0 0.0
      %300 = vmatpush1.msra.mxu0 0.0
      %301 = vmatprep.subr.mxu0 0.0
      %302 = vmatpush1.msra.mxu0 0.0
      %303 = vmatprep.subr.mxu0 0.0
      %304 = vmatpush1.msra.mxu0 0.0
      %305 = vmatprep.subr.mxu0 0.0
      %306 = vmatpush1.msra.mxu0 0.0
      %307 = vmatprep.subr.mxu0 0.0
      %308 = vmatpush1.msra.mxu0 0.0
      %309 = vmatprep.subr.mxu0 0.0
      %310 = vmatpush1.msra.mxu0 0.0
      %311 = vmatprep.subr.mxu0 0.0
      %312 = vmatpush1.msra.mxu0 0.0
      %313 = vmatprep.subr.mxu0 0.0
      %314 = vmatpush1.msra.mxu0 0.0
      %315 = vmatprep.mubr.f32.mxu0 0.0
      %316 = vmatmul.mubr.f32.gmra.mrb[0].mxu0 %v246
      %v317 = vpop.f32.mrb[0].mxu0
      %v318 = vadd.f32 %v237, %v317
      %v319 = vpop.f32.mrb[0].mxu0
      %320 = vdwg.mxu0
      %v321 = vmax.f32 %v318, 0.0
      %v322 = vld [vmem:[%s3] sm:$0xf]
      %v323 = vld [vmem:[%s4] sm:$0x1]
      %v325 = vsel %vm245, %v321, 0
      %v328 = vsel %vm229, %v322, 0
      %330 = vmatprep.subr.mxu0 0.0
      %331 = vmatpush1.msra.mxu0 %v328
      %332 = vmatprep.subr.mxu0 0.0
      %333 = vmatpush1.msra.mxu0 0.0
      %334 = vmatprep.subr.mxu0 0.0
      %335 = vmatpush1.msra.mxu0 0.0
      %336 = vmatprep.subr.mxu0 0.0
      %337 = vmatpush1.msra.mxu0 0.0
      %338 = vmatprep.subr.mxu0 0.0
      %339 = vmatpush1.msra.mxu0 0.0
      %340 = vmatprep.subr.mxu0 0.0
      %341 = vmatpush1.msra.mxu0 0.0
      %342 = vmatprep.subr.mxu0 0.0
      %343 = vmatpush1.msra.mxu0 0.0
      %344 = vmatprep.subr.mxu0 0.0
      %345 = vmatpush1.msra.mxu0 0.0
      %346 = vmatprep.subr.mxu0 0.0
      %347 = vmatpush1.msra.mxu0 0.0
      %348 = vmatprep.subr.mxu0 0.0
      %349 = vmatpush1.msra.mxu0 0.0
      %350 = vmatprep.subr.mxu0 0.0
      %351 = vmatpush1.msra.mxu0 0.0
      %352 = vmatprep.subr.mxu0 0.0
      %353 = vmatpush1.msra.mxu0 0.0
      %354 = vmatprep.subr.mxu0 0.0
      %355 = vmatpush1.msra.mxu0 0.0
      %356 = vmatprep.subr.mxu0 0.0
      %357 = vmatpush1.msra.mxu0 0.0
      %358 = vmatprep.subr.mxu0 0.0
      %359 = vmatpush1.msra.mxu0 0.0
      %360 = vmatprep.subr.mxu0 0.0
      %361 = vmatpush1.msra.mxu0 0.0
      %362 = vmatprep.subr.mxu0 0.0
      %363 = vmatpush1.msra.mxu0 0.0
      %364 = vmatprep.subr.mxu0 0.0
      %365 = vmatpush1.msra.mxu0 0.0
      %366 = vmatprep.subr.mxu0 0.0
      %367 = vmatpush1.msra.mxu0 0.0
      %368 = vmatprep.subr.mxu0 0.0
      %369 = vmatpush1.msra.mxu0 0.0
      %370 = vmatprep.subr.mxu0 0.0
      %371 = vmatpush1.msra.mxu0 0.0
      %372 = vmatprep.subr.mxu0 0.0
      %373 = vmatpush1.msra.mxu0 0.0
      %374 = vmatprep.subr.mxu0 0.0
      %375 = vmatpush1.msra.mxu0 0.0
      %376 = vmatprep.subr.mxu0 0.0
      %377 = vmatpush1.msra.mxu0 0.0
      %378 = vmatprep.subr.mxu0 0.0
      %379 = vmatpush1.msra.mxu0 0.0
      %380 = vmatprep.subr.mxu0 0.0
      %381 = vmatpush1.msra.mxu0 0.0
      %382 = vmatprep.subr.mxu0 0.0
      %383 = vmatpush1.msra.mxu0 0.0
      %384 = vmatprep.subr.mxu0 0.0
      %385 = vmatpush1.msra.mxu0 0.0
      %386 = vmatprep.subr.mxu0 0.0
      %387 = vmatpush1.msra.mxu0 0.0
      %388 = vmatprep.subr.mxu0 0.0
      %389 = vmatpush1.msra.mxu0 0.0
      %390 = vmatprep.subr.mxu0 0.0
      %391 = vmatpush1.msra.mxu0 0.0
      %392 = vmatprep.subr.mxu0 0.0
      %393 = vmatpush1.msra.mxu0 0.0
      %394 = vmatprep.mubr.f32.mxu0 0.0
      %395 = vmatmul.mubr.f32.gmra.mrb[0].mxu0 %v325
      %v396 = vpop.f32.mrb[0].mxu0
      %v397 = vadd.f32 %v323, %v396
      %v398 = vpop.f32.mrb[0].mxu0
      %399 = vdwg.mxu0
      %v400 = vxor.u32 %v397, 2147483648
      %v401 = vmul.f32 %v400, 1.442695
      %v402 = vpow.pop %v401
      %v403 = vadd.f32 %v402, 1.0
      %v404 = vrcp.pop %v403
      %v405 = vmul.f32 1.0, %v404
      %v406 = vlaneseq
      %v407 = vshrl.u32 %v406, 7
      %v408 = vsub.s32 0, %v407
      %v409 = vrot.slane %v405, %v408
      %411 = vbcast.lane.b32.xlu0 %v409, 256
      %v412 = vpop.permute.xlu0 %411
      %v415 = vunpack.c.l.s4 839922192
      %v416 = vunpack.c.0.s8 %v415
      %v417 = vlaneseq
      %v418 = vshrl.u32 %v417, 7
      %v419 = vsub.s32 %v416, %v418
      %v420 = vrot.slane %v412, %v419
      %v422 = vmul.f32 %v225, %v420
      %423 = vst [vmem:[%s224] sm:$0xff] %v422
      %p424 = scmp.lt.s32.totalorder %s16, 3
      %s425 = scalar_select %p424, %s16, 3
      %s426 = smul.addr %s425, 2
      %s427 = smul.addr %s426, 4
      %s428 = scalar_lea.vmem %s5, %s427
      // Predicated region
      $region41: #{afb_forward.1} parent=39 // pred_check
        %p429 = pneg %p144
      $region42: #{afb_forward.1} parent=39 // pred_check_branch
        %431 = sbr.rel (%p429) target = $region44
      $region43: #{afb_forward.1} parent=39 // pred_region
        _
      $region44: #{afb_forward.1} parent=39 // pred_fallthru
        _
    $region40: #{afb_forward.1} parent=5 // pred_fallthru
      _
    %p432 = scmp.le.s32.totalorder 2, %s11
    // Predicated region
    $region45: #{afb_forward.1} parent=5 // pred_check
      %p433 = pneg %p432
    $region46: #{afb_forward.1} parent=5 // pred_check_branch
      %435 = sbr.rel (%p433) target = $region48
    $region47: #{afb_forward.1} parent=5 // pred_region
      %s436 = ssub.s32 %s11, 2
      // Predicated region
      $region49: #{afb_forward.1} parent=47 // pred_check
        %p437 = pneg %p150
      $region50: #{afb_forward.1} parent=47 // pred_check_branch
        %439 = sbr.rel (%p437) target = $region52
      $region51: #{afb_forward.1} parent=47 // pred_region
        %p440 = scmp.lt.s32.totalorder %s17, 3
        %s441 = scalar_select %p440, %s17, 3
        %s442 = smul.addr %s441, 2
        %s443 = smul.addr %s442, 4
        %s444 = scalar_lea.vmem %s5, %s443
      $region52: #{afb_forward.1} parent=47 // pred_fallthru
        _
    $region48: #{afb_forward.1} parent=5 // pred_fallthru
      _
  $region6: #{afb_forward.1} parent=0 // loop_footer
    %s15 = sadd.s32 1, %s11
  $region7: #{afb_forward.1} parent=0 // loop_footer_branch
    %10 = sbr.rel target = $region3
  $region8: #{afb_forward.1} parent=0 // loop_exit
    _

</llo_original>
